<compile_context>
chip_gen: v7x
topology: tpu7x:2x2x1
jax: 0.10.0
libtpu: 0.0.40
codegen_flags: <defaults>
</compile_context>

<pallas_src>
import jax
import jax.numpy as jnp
from jax.experimental import pallas as pl
from jax.experimental.pallas import tpu as pltpu

_MIB = 1024 * 1024


def _h_swish_kernel(x_ref, o_ref):
    x = x_ref[...].astype(jnp.float32)
    # h_sigmoid(x) = relu6(x + 3) / 6 ; relu6(t) = clamp(t, 0, 6)
    hs = jnp.clip(x + 3.0, 0.0, 6.0) * (1.0 / 6.0)
    o_ref[...] = (x * hs).astype(o_ref.dtype)


def _h_swish_jnp(x):
    xf = x.astype(jnp.float32)
    return (xf * (jnp.clip(xf + 3.0, 0.0, 6.0) * (1.0 / 6.0))).astype(x.dtype)


def _round_up(a: int, b: int) -> int:
    return -(-a // b) * b


def _pick_block_bytes() -> int:
    """Per-generation block budget: amortize the ~0.35us/grid-step overhead
    while staying safely inside the scoped-VMEM budget of every generation."""
    try:
        vmem_cap = int(pltpu.get_tpu_info().vmem_capacity_bytes)
    except Exception:  # interpret mode / API drift: be conservative.
        vmem_cap = 0
    if 0 < vmem_cap <= 64 * _MIB:
        # v7x-class (64 MiB VMEM, 3.2 TB/s HBM): larger blocks; explicit
        # vmem_limit_bytes at the call site keeps 4x blocks legal.
        return 6 * _MIB
    # v5e / v6e / unknown: 2 MiB blocks sit at ~85% of HBM roofline and keep
    # 2(in)+2(out) double-buffers = 8 MiB inside v5e's default scoped VMEM.
    return 2 * _MIB


def _pick_lanes(n: int) -> int:
    """Largest lane-dense width that divides n exactly (free reshape)."""
    for lanes in (1024, 512, 256, 128):
        if n % lanes == 0:
            return lanes
    return 0


def h_swish(x: jax.Array) -> jax.Array:
    """Apply h_swish elementwise to an NCHW (or any-shape) tensor."""
    orig_shape = x.shape
    dtype = x.dtype
    elem_bytes = jnp.dtype(dtype).itemsize
    n = x.size

    lanes = _pick_lanes(n)
    if lanes == 0 or n < 128:
        # Ragged / tiny input: a fused XLA elementwise op is already at
        # roofline and avoids any pad/slice HBM passes.
        return _h_swish_jnp(x)

    # Minimum sublane multiple per dtype packing (f32: 8, bf16: 16, int8: 32).
    sub_mult = max(8, 32 // elem_bytes)
    rows = n // lanes

    block_bytes = _pick_block_bytes()
    tile_rows = max(sub_mult, block_bytes // (lanes * elem_bytes))
    tile_rows = _round_up(tile_rows, sub_mult)

    # Keep >= ~8 grid steps on large inputs so the "parallel" axis splits
    # evenly across v7x's two TensorCores, but never shrink blocks below
    # ~512 KiB (bandwidth floor).  No effect on v5e/v6e (single TC).
    min_block_rows = _round_up(
        max(sub_mult, (512 * 1024) // (lanes * elem_bytes)), sub_mult)
    balance_rows = _round_up(max(1, -(-rows // 8)), sub_mult)
    tile_rows = max(min(tile_rows, balance_rows), min_block_rows)

    if tile_rows >= rows:
        # Single full-extent block (exempt from the sublane-multiple rule).
        tile_rows = rows

    grid = (pl.cdiv(rows, tile_rows),)  # partial last block is masked by Pallas
    slab = x.reshape(rows, lanes)       # free view: n == rows * lanes

    block_bytes_actual = tile_rows * lanes * elem_bytes
    # 2 in-buffers + 2 out-buffers + headroom for Mosaic internal scratch.
    vmem_limit = min(4 * block_bytes_actual + 12 * _MIB, 48 * _MIB)

    out = pl.pallas_call(
        _h_swish_kernel,
        out_shape=jax.ShapeDtypeStruct(slab.shape, dtype),
        grid_spec=pltpu.PrefetchScalarGridSpec(
            num_scalar_prefetch=0,
            grid=grid,
            in_specs=[pl.BlockSpec((tile_rows, lanes), lambda i: (i, 0))],
            out_specs=pl.BlockSpec((tile_rows, lanes), lambda i: (i, 0)),
        ),
        compiler_params=pltpu.CompilerParams(
            dimension_semantics=("parallel",),
            vmem_limit_bytes=vmem_limit,
        ),
        cost_estimate=pl.CostEstimate(
            flops=5 * n,
            transcendentals=0,
            bytes_accessed=2 * n * elem_bytes,
        ),
    )(slab)

    return out.reshape(orig_shape)


def h_swish_ref(x):
    xf = x.astype(jnp.float32)
    return (xf * (jnp.clip(xf + 3.0, 0.0, 6.0) / 6.0)).astype(x.dtype)


if __name__ == "__main__":
    key = jax.random.PRNGKey(0)
    k0, k1, k2, k3 = jax.random.split(key, 4)

    # Primary test: NCHW shape matching the PyTorch module's conv-style inputs
    # (2048 elements -> single lane-dense block through the Pallas kernel).
    x = jax.random.normal(k0, (2, 4, 16, 16), dtype=jnp.float32) * 4.0
    y = jax.block_until_ready(h_swish(x))
    assert y.shape == x.shape and y.dtype == x.dtype
    assert jnp.allclose(y, h_swish_ref(x), atol=1e-6, rtol=1e-6), "f32 mismatch"

    # Multi-step grid with a masked partial last block (160 rows, 128-row tiles).
    x_big = jax.random.normal(k1, (1, 8, 160, 128), dtype=jnp.float32) * 4.0
    y_big = jax.block_until_ready(h_swish(x_big))
    assert jnp.allclose(y_big, h_swish_ref(x_big), atol=1e-6, rtol=1e-6), \
        "partial-block mismatch"

    # bf16 path (f32 internal math, bf16 HBM traffic).
    x_bf = (jax.random.normal(k2, (2, 8, 32, 32), dtype=jnp.float32) * 4.0
            ).astype(jnp.bfloat16)
    y_bf = jax.block_until_ready(h_swish(x_bf))
    assert y_bf.dtype == jnp.bfloat16
    assert jnp.allclose(y_bf.astype(jnp.float32),
                        h_swish_ref(x_bf).astype(jnp.float32),
                        atol=2e-2, rtol=2e-2), "bf16 mismatch"

    # Ragged element count -> fused-jnp fallback path.
    x_rag = jax.random.normal(k3, (2, 3, 5, 7), dtype=jnp.float32) * 4.0
    y_rag = jax.block_until_ready(h_swish(x_rag))
    assert jnp.allclose(y_rag, h_swish_ref(x_rag), atol=1e-6, rtol=1e-6), \
        "fallback mismatch"

    print("KERNEL_OK")
</pallas_src>

<mosaic_0001>
module attributes {stable_mosaic.version = 11 : i64} {
  func.func @_h_swish_kernel(%arg0: i32, %arg1: memref<2x1024xf32, #tpu.memory_space<vmem>>, %arg2: memref<2x1024xf32, #tpu.memory_space<vmem>>) attributes {dimension_semantics = [#tpu.dimension_semantics<parallel>], iteration_bounds = array<i64: 1>, scalar_prefetch = 0 : i64, scratch_operands = 0 : i64, tpu.core_type = #tpu.core_type<tc>, window_params = [{transform_indices = @transform_0, window_bounds = array<i64: 2, 1024>}, {transform_indices = @transform_1, window_bounds = array<i64: 2, 1024>}]} {
    %c0 = arith.constant 0 : index
    %c0_0 = arith.constant 0 : index
    %0 = vector.load %arg1[%c0, %c0_0] : memref<2x1024xf32, #tpu.memory_space<vmem>>, vector<2x1024xf32>
    %cst = arith.constant 3.000000e+00 : f32
    %1 = vector.broadcast %cst : f32 to vector<2x1024xf32>
    %2 = arith.addf %0, %1 : vector<2x1024xf32>
    %cst_1 = arith.constant 0.000000e+00 : f32
    %cst_2 = arith.constant 6.000000e+00 : f32
    %3 = vector.broadcast %cst_1 : f32 to vector<2x1024xf32>
    %4 = arith.maximumf %3, %2 : vector<2x1024xf32>
    %5 = vector.broadcast %cst_2 : f32 to vector<2x1024xf32>
    %6 = arith.minimumf %5, %4 : vector<2x1024xf32>
    %cst_3 = arith.constant 0.166666672 : f32
    %7 = vector.broadcast %cst_3 : f32 to vector<2x1024xf32>
    %8 = arith.mulf %6, %7 : vector<2x1024xf32>
    %9 = arith.mulf %0, %8 : vector<2x1024xf32>
    %c0_4 = arith.constant 0 : index
    %c0_5 = arith.constant 0 : index
    %10 = vector.load %arg2[%c0_4, %c0_5] : memref<2x1024xf32, #tpu.memory_space<vmem>>, vector<2x1024xf32>
    tpu.vector_store %arg2[%c0_4, %c0_5], %9 {strides = array<i32>} : memref<2x1024xf32, #tpu.memory_space<vmem>>, vector<2x1024xf32>,
    return
  }
  func.func @transform_0(%arg0: i32) -> (i32, i32) {
    %c0_i32 = arith.constant 0 : i32
    %c0_i32_0 = arith.constant 0 : i32
    return %arg0, %c0_i32 : i32, i32
  }
  func.func @transform_1(%arg0: i32) -> (i32, i32) {
    %c0_i32 = arith.constant 0 : i32
    %c0_i32_0 = arith.constant 0 : i32
    return %arg0, %c0_i32 : i32, i32
  }
}

</mosaic_0001>

<llo_original>
// kernel: tpu_custom_call.1
$region0: #{tpu_custom_call.1}
  #allocation0 [shape = 'u32[]', space=smem, size = 0x4, offset = 0x4, fixed_abs, tag = 'smem constant byte address 0x4 - core index']
  #allocation1 [shape = 'u32[144,128]{1,0:T(1,128)}', space=vmem, size = 0x12000, scoped, tag = 'internal scratch']
  %s0 = inlined_call_operand.hbm [shape: f32[2,1024], index: 0, kind: input, shape index: {}]
  %s1 = inlined_call_operand.hbm [shape: f32[2,1024], index: 1, kind: output, shape index: {}]
  %s2 = sld [smem:[#allocation0]]
  $region18: #{tpu_custom_call.1} parent=0
    _
  %s4 = ssub.s32 1, %s2
  %s5 = scalar_select 0, %s4, %s2
  $region1: #{tpu_custom_call.1} parent=0
    #allocation2 [shape = 'u8[8192]{0}', space=vmem, size = 0x2000, scoped, tag = 'input window, operand 0, single buffered']
    #allocation3 [shape = 's32[1]{0}', space=sflag, size = 0x4, scoped, tag = 'scoped memory for tpu_custom_call.1']
    #allocation4 [shape = 's32[1]{0}', space=sflag, size = 0x4, scoped, tag = 'scoped memory for tpu_custom_call.1']
    #allocation5 [shape = 'u8[8192]{0}', space=vmem, size = 0x2000, scoped, tag = 'output window, operand 0, single buffered']
    %6 = vsyncpa [#allocation3], 0
    %7 = vsyncpa [#allocation4], 0
    // Predicated region
    $region2: #{tpu_custom_call.1} parent=1 // pred_check
      _
    $region3: #{tpu_custom_call.1} parent=1 // pred_check_branch
      %9 = sbr.rel (0) target = $region5
    $region4: #{tpu_custom_call.1} parent=1 // pred_region
      %s11 = ssub.s32 256, 256
      %12 = vsyncadd [#allocation3], %s11
      %s14 = sshll.u32 [#allocation2], 4
      %s15 = int_to_ptr.vmem [resolvable:$true] %s14
      %17 = dma.hbm_to_vmem [thread:$0]  %s0, 256, %s15, [#allocation3]
    $region5: #{tpu_custom_call.1} parent=1 // pred_fallthru
      _
    // Predicated region
    $region6: #{tpu_custom_call.1} parent=1 // pred_check
      _
    $region7: #{tpu_custom_call.1} parent=1 // pred_check_branch
      %19 = sbr.rel (0) target = $region9
    $region8: #{tpu_custom_call.1} parent=1 // pred_region
      %20 = dma.done [#allocation3], 256
    $region9: #{tpu_custom_call.1} parent=1 // pred_fallthru
      _
    %v21 = vld [vmem:[#allocation2] sm:$0xff]
    %v22 = vld [vmem:[#allocation2 + $0x8] sm:$0xff]
    %v23 = vadd.f32 %v21, 3.0
    %v24 = vadd.f32 %v22, 3.0
    %v25 = vmax.f32 %v23, 0.0
    %v26 = vmax.f32 %v24, 0.0
    %v27 = vmin.f32 %v25, 6.0
    %v28 = vmin.f32 %v26, 6.0
    %v29 = vmul.f32 %v27, 0.16666667
    %v30 = vmul.f32 %v28, 0.16666667
    %v31 = vmul.f32 %v21, %v29
    %v32 = vmul.f32 %v22, %v30
    %33 = vst [vmem:[#allocation5] sm:$0xff] %v31
    %34 = vst [vmem:[#allocation5 + $0x8] sm:$0xff] %v32
    // Predicated region
    $region10: #{tpu_custom_call.1} parent=1 // pred_check
      _
    $region11: #{tpu_custom_call.1} parent=1 // pred_check_branch
      %36 = sbr.rel (0) target = $region13
    $region12: #{tpu_custom_call.1} parent=1 // pred_region
      %s38 = ssub.s32 256, 256
      %39 = vsyncadd [#allocation4], %s38
      %s41 = sshll.u32 [#allocation5], 4
      %s42 = int_to_ptr.vmem [resolvable:$true] %s41
      %44 = dma.vmem_to_hbm [thread:$0]  %s42, 256, %s1, [#allocation4]
    $region13: #{tpu_custom_call.1} parent=1 // pred_fallthru
      _
    // Predicated region
    $region14: #{tpu_custom_call.1} parent=1 // pred_check
      _
    $region15: #{tpu_custom_call.1} parent=1 // pred_check_branch
      %46 = sbr.rel (0) target = $region17
    $region16: #{tpu_custom_call.1} parent=1 // pred_region
      %47 = dma.done [#allocation4], 256
    $region17: #{tpu_custom_call.1} parent=1 // pred_fallthru
      _
    %48 = vsyncpa [#allocation3], 1
    %49 = vsyncpa [#allocation4], 1

</llo_original>
